<compile_context>
chip_gen: v5e
topology: v5e:2x2
jax: 0.10.0
libtpu: 0.0.40
codegen_flags: <defaults>
</compile_context>

<pallas_src>
import functools
import math

import jax
import jax.numpy as jnp
from jax.experimental import pallas as pl
from jax.experimental.pallas import tpu as pltpu


_LANE = 128
_SUBLANE = 8
# Conservative per-kernel VMEM budget that fits all listed generations
# (v7x has only 64 MiB physical VMEM; we stay well under it).
_VMEM_BUDGET = 40 * 1024 * 1024


def _round_up(v: int, m: int) -> int:
    return (v + m - 1) // m * m


# ---------------------------------------------------------------------------
# Kernels
# ---------------------------------------------------------------------------
def _linear_kernel(x_ref, w_ref, b_ref, o_ref):
    """Fast path: the whole contraction dim is resident in VMEM.

    2-D grid (batch tiles x output-column tiles): no accumulator scratch,
    no pl.when phases, bias added unconditionally, one lane-dense store per
    (i, j) tile.
    """
    acc = jnp.dot(x_ref[...], w_ref[...], preferred_element_type=jnp.float32)
    o_ref[...] = (acc + b_ref[...]).astype(o_ref.dtype)


def _linear_kernel_ksplit(x_ref, w_ref, b_ref, o_ref):
    """Fallback for very large contraction dims: 3-D grid, reduction last.

    Accumulates directly into the f32 output block (its index_map ignores k,
    so the block is resident across the reduction) -> no extra VMEM scratch.
    Bias seeds the accumulator exactly once per (i, j) tile.
    """
    k = pl.program_id(2)

    @pl.when(k == 0)
    def _init():
        o_ref[...] = jnp.broadcast_to(b_ref[...], o_ref.shape).astype(
            o_ref.dtype
        )

    o_ref[...] += jnp.dot(
        x_ref[...], w_ref[...], preferred_element_type=jnp.float32
    )


# ---------------------------------------------------------------------------
# One-time parameter preparation (outside the per-step hot path)
# ---------------------------------------------------------------------------
def prepare_linear_params(w, b, *, operand_dtype=jnp.bfloat16):
    """Transpose / cast / pad nn.Linear parameters once.

    w: [C, D] (PyTorch nn.Linear weight layout), b: [C].
    Returns (w_t [D, C_pad] in operand_dtype, b_pad [1, C_pad] in f32).
    Only the output dim is padded (to a lane-dense multiple of 128); the
    contraction dim is left unpadded.
    """
    C, _D = w.shape
    C_pad = _round_up(C, _LANE)
    # Cast BEFORE padding so the pad pass writes half the bytes.
    w_t = jnp.transpose(w).astype(operand_dtype)            # [D, C]
    w_t = jnp.pad(w_t, ((0, 0), (0, C_pad - C)))            # [D, C_pad]
    b_pad = jnp.pad(
        b.astype(jnp.float32).reshape(1, -1), ((0, 0), (0, C_pad - C))
    )                                                        # [1, C_pad]
    return w_t, b_pad


# ---------------------------------------------------------------------------
# Forward (jitted: pad / cast / pallas_call / slice all fuse under XLA)
# ---------------------------------------------------------------------------
@functools.partial(jax.jit, static_argnames=("out_features", "tm", "tn", "tk"))
def linear_forward_prepared(x, w_prepped, b_prepped, *, out_features,
                            tm=None, tn=None, tk=None):
    """y = x @ W^T + b with pre-prepared (transposed/padded/cast) weights.

    x:         [B, D]
    w_prepped: [D, C_pad]  (operand dtype, e.g. bf16)
    b_prepped: [1, C_pad]  (f32)
    returns    [B, out_features] in x.dtype (f32 MXU accumulation).
    """
    B, D = x.shape
    D_w, C_pad = w_prepped.shape
    if D_w != D:
        raise ValueError(f"weight contraction dim {D_w} != input dim {D}")
    if C_pad % _LANE != 0:
        raise ValueError("prepared weight output dim must be a multiple of 128")

    operand_dtype = w_prepped.dtype
    operand_bytes = jnp.dtype(operand_dtype).itemsize
    out_dtype = x.dtype
    out_bytes = jnp.dtype(out_dtype).itemsize

    # ---- tile selection / validation --------------------------------------
    if tm is None:
        tm = min(256, _round_up(B, _SUBLANE))
    if tm % _SUBLANE != 0:
        raise ValueError(f"tm={tm} must be a multiple of {_SUBLANE}")
    tm = min(tm, _round_up(B, _SUBLANE))

    if tn is None:
        tn = 256 if C_pad % 256 == 0 else _LANE
    if tn % _LANE != 0 or C_pad % tn != 0:
        raise ValueError(f"tn={tn} must be a multiple of 128 dividing {C_pad}")

    B_pad = _round_up(_round_up(B, _SUBLANE), tm)

    # Cast before padding; pad only the batch dim, and only if needed.
    xq = x.astype(operand_dtype)
    if B_pad != B:
        xq = jnp.pad(xq, ((0, B_pad - B), (0, 0)))

    flops = 2 * B_pad * D * C_pad
    bytes_accessed = (
        B_pad * D * operand_bytes
        + D * C_pad * operand_bytes
        + C_pad * 4
        + B_pad * C_pad * out_bytes
    )
    cost = pl.CostEstimate(
        flops=flops, transcendentals=0, bytes_accessed=bytes_accessed
    )

    # VMEM need for the no-reduction-split path (double-buffered tiles).
    need = (2 * tm * D * operand_bytes          # x tile
            + 2 * D * tn * operand_bytes        # W tile
            + 2 * tm * tn * 4                   # output tile (worst case f32)
            + 2 * tn * 4)                       # bias tile

    if need <= _VMEM_BUDGET and tk is None:
        # ---- fast path: 2-D grid, whole contraction dim per tile ----------
        vmem_limit = int(min(max(2 * need, 32 << 20), 60 << 20))
        out = pl.pallas_call(
            _linear_kernel,
            out_shape=jax.ShapeDtypeStruct((B_pad, C_pad), out_dtype),
            grid=(B_pad // tm, C_pad // tn),
            in_specs=[
                pl.BlockSpec((tm, D), lambda i, j: (i, 0)),
                # W/bias tiles depend only on the output-column tile.
                pl.BlockSpec((D, tn), lambda i, j: (0, j)),
                pl.BlockSpec((1, tn), lambda i, j: (0, j)),
            ],
            out_specs=pl.BlockSpec((tm, tn), lambda i, j: (i, j)),
            compiler_params=pltpu.CompilerParams(
                dimension_semantics=("parallel", "parallel"),
                vmem_limit_bytes=vmem_limit,
            ),
            cost_estimate=cost,
        )(xq, w_prepped, b_prepped)
    else:
        # ---- fallback: split the contraction dim (very large D) -----------
        if tk is None:
            tk = 1024
        if tk % _LANE != 0:
            raise ValueError(f"tk={tk} must be a multiple of 128")
        tk = min(tk, _round_up(D, _LANE))
        D_pad = _round_up(D, tk)
        xq_k = jnp.pad(xq, ((0, 0), (0, D_pad - D)))
        wq_k = jnp.pad(w_prepped, ((0, D_pad - D), (0, 0)))
        need_k = (2 * tm * tk * operand_bytes + 2 * tk * tn * operand_bytes
                  + 2 * tm * tn * 4 + 2 * tn * 4)
        vmem_limit = int(min(max(2 * need_k, 32 << 20), 60 << 20))
        acc = pl.pallas_call(
            _linear_kernel_ksplit,
            out_shape=jax.ShapeDtypeStruct((B_pad, C_pad), jnp.float32),
            grid=(B_pad // tm, C_pad // tn, D_pad // tk),
            in_specs=[
                pl.BlockSpec((tm, tk), lambda i, j, k: (i, k)),
                pl.BlockSpec((tk, tn), lambda i, j, k: (k, j)),
                pl.BlockSpec((1, tn), lambda i, j, k: (0, j)),
            ],
            out_specs=pl.BlockSpec((tm, tn), lambda i, j, k: (i, j)),
            compiler_params=pltpu.CompilerParams(
                dimension_semantics=("parallel", "parallel", "arbitrary"),
                vmem_limit_bytes=vmem_limit,
            ),
            cost_estimate=cost,
        )(xq_k, wq_k, b_prepped)
        out = acc.astype(out_dtype)

    return out[:B, :out_features]


def linear_forward(x, w, b, *, operand_dtype=jnp.bfloat16):
    """Convenience drop-in: prepares params and runs the forward pass.

    For real training/inference loops call `prepare_linear_params` once and
    reuse the result with `linear_forward_prepared`.
    """
    w_p, b_p = prepare_linear_params(w, b, operand_dtype=operand_dtype)
    return linear_forward_prepared(x, w_p, b_p, out_features=w.shape[0])


if __name__ == "__main__":
    # Small shapes consistent with nn.Linear(input_dim, num_classes).
    batch = 8
    input_dim = 32
    num_classes = 16

    key = jax.random.PRNGKey(0)
    kx, kw, kb = jax.random.split(key, 3)

    # PyTorch-style uniform init bounds (deterministic synthetic params).
    bound = 1.0 / math.sqrt(input_dim)
    w = jax.random.uniform(
        kw, (num_classes, input_dim), jnp.float32, minval=-bound, maxval=bound
    )
    b = jax.random.uniform(
        kb, (num_classes,), jnp.float32, minval=-bound, maxval=bound
    )
    x = jax.random.normal(kx, (batch, input_dim), jnp.float32)

    # ---- default path: bf16 MXU operands, f32 accumulation ----------------
    w_bf16, b_pad = prepare_linear_params(w, b, operand_dtype=jnp.bfloat16)
    out_bf16 = jax.block_until_ready(
        linear_forward_prepared(x, w_bf16, b_pad, out_features=num_classes)
    )
    # Reference with the same operand quantization (f32 accumulation).
    ref_bf16 = (
        x.astype(jnp.bfloat16).astype(jnp.float32)
        @ w.astype(jnp.bfloat16).astype(jnp.float32).T
    ) + b
    assert out_bf16.shape == (batch, num_classes)
    assert out_bf16.dtype == x.dtype
    assert jnp.allclose(out_bf16, ref_bf16, atol=1e-4, rtol=1e-4)

    # ---- f32 operand path: tight check vs exact torch semantics -----------
    w_f32, b_pad32 = prepare_linear_params(w, b, operand_dtype=jnp.float32)
    out_f32 = jax.block_until_ready(
        linear_forward_prepared(x, w_f32, b_pad32, out_features=num_classes)
    )
    ref = x @ w.T + b
    assert jnp.allclose(out_f32, ref, atol=1e-5, rtol=1e-5)

    print("KERNEL_OK")
</pallas_src>

<mosaic_0001>
module attributes {stable_mosaic.version = 11 : i64} {
  func.func @_linear_kernel(%arg0: i32, %arg1: i32, %arg2: memref<8x32xbf16, #tpu.memory_space<vmem>>, %arg3: memref<32x128xbf16, #tpu.memory_space<vmem>>, %arg4: memref<1x128xf32, #tpu.memory_space<vmem>>, %arg5: memref<8x128xf32, #tpu.memory_space<vmem>>) attributes {dimension_semantics = [#tpu.dimension_semantics<parallel>, #tpu.dimension_semantics<parallel>], iteration_bounds = array<i64: 1, 1>, scalar_prefetch = 0 : i64, scratch_operands = 0 : i64, tpu.core_type = #tpu.core_type<tc>, window_params = [{transform_indices = @transform_0, window_bounds = array<i64: 8, 32>}, {transform_indices = @transform_1, window_bounds = array<i64: 32, 128>}, {transform_indices = @transform_2, window_bounds = array<i64: 1, 128>}, {transform_indices = @transform_3, window_bounds = array<i64: 8, 128>}]} {
    %c0 = arith.constant 0 : index
    %c0_0 = arith.constant 0 : index
    %0 = vector.load %arg2[%c0, %c0_0] : memref<8x32xbf16, #tpu.memory_space<vmem>>, vector<8x32xbf16>
    %c0_1 = arith.constant 0 : index
    %c0_2 = arith.constant 0 : index
    %1 = vector.load %arg3[%c0_1, %c0_2] : memref<32x128xbf16, #tpu.memory_space<vmem>>, vector<32x128xbf16>
    %cst = arith.constant dense<0.000000e+00> : vector<8x128xf32>
    %2 = tpu.matmul %0, %1, %cst {dimension_numbers = #tpu.dot_dimension_numbers<[1], [0], [0], [1], [0, 0, 1, 1], [], []>} : vector<8x32xbf16>, vector<32x128xbf16>, vector<8x128xf32> -> vector<8x128xf32>
    %c0_3 = arith.constant 0 : index
    %c0_4 = arith.constant 0 : index
    %3 = vector.load %arg4[%c0_3, %c0_4] : memref<1x128xf32, #tpu.memory_space<vmem>>, vector<1x128xf32>
    %4 = vector.broadcast %3 : vector<1x128xf32> to vector<8x128xf32>
    %5 = arith.addf %2, %4 : vector<8x128xf32>
    %c0_5 = arith.constant 0 : index
    %c0_6 = arith.constant 0 : index
    %6 = vector.load %arg5[%c0_5, %c0_6] : memref<8x128xf32, #tpu.memory_space<vmem>>, vector<8x128xf32>
    tpu.vector_store %arg5[%c0_5, %c0_6], %5 {strides = array<i32>} : memref<8x128xf32, #tpu.memory_space<vmem>>, vector<8x128xf32>,
    return
  }
  func.func @transform_0(%arg0: i32, %arg1: i32) -> (i32, i32) {
    %c0_i32 = arith.constant 0 : i32
    %c0_i32_0 = arith.constant 0 : i32
    return %arg0, %c0_i32 : i32, i32
  }
  func.func @transform_1(%arg0: i32, %arg1: i32) -> (i32, i32) {
    %c0_i32 = arith.constant 0 : i32
    %c0_i32_0 = arith.constant 0 : i32
    return %c0_i32, %arg1 : i32, i32
  }
  func.func @transform_2(%arg0: i32, %arg1: i32) -> (i32, i32) {
    %c0_i32 = arith.constant 0 : i32
    %c0_i32_0 = arith.constant 0 : i32
    return %c0_i32, %arg1 : i32, i32
  }
  func.func @transform_3(%arg0: i32, %arg1: i32) -> (i32, i32) {
    %c0_i32 = arith.constant 0 : i32
    return %arg0, %arg1 : i32, i32
  }
}

</mosaic_0001>

<llo_original>
// kernel: linear_forward_prepared.1
$region0: #{linear_forward_prepared.1}
  #allocation0 [shape = 'u32[]', space=smem, size = 0x4, offset = 0x4, fixed_abs, tag = 'smem constant byte address 0x4 - core index']
  #allocation1 [shape = 'u32[72,128]{1,0:T(1,128)}', space=vmem, size = 0x9000, scoped, tag = 'internal scratch']
  %s0 = inlined_call_operand.vmem [shape: bf16[8,32], index: 0, kind: input, shape index: {}]
  %s1 = inlined_call_operand.hbm [shape: bf16[32,128], index: 1, kind: input, shape index: {}]
  %s2 = inlined_call_operand.vmem [shape: f32[1,128], index: 2, kind: input, shape index: {}]
  %s3 = inlined_call_operand.hbm [shape: f32[8,128], index: 3, kind: output, shape index: {}]
  %s4 = sld [smem:[#allocation0]]
  $region26: #{linear_forward_prepared.1} parent=0
    _
  %s6 = ssub.s32 1, %s4
  %s7 = scalar_select 0, %s6, %s4
  $region1: #{linear_forward_prepared.1} parent=0
    #allocation2 [shape = 'u8[8192]{0}', space=vmem, size = 0x2000, scoped, tag = 'input window, operand 1, single buffered']
    #allocation3 [shape = 's32[1]{0}', space=sflag, size = 0x4, scoped, tag = 'scoped memory for linear_forward_prepared.1']
    #allocation4 [shape = 's32[1]{0}', space=sflag, size = 0x4, scoped, tag = 'scoped memory for linear_forward_prepared.1']
    #allocation5 [shape = 'u8[4096]{0}', space=vmem, size = 0x1000, scoped, tag = 'output window, operand 0, single buffered']
    %8 = vsyncpa [#allocation3], 0
    %9 = vsyncpa [#allocation4], 0
    // Predicated region
    $region2: #{linear_forward_prepared.1} parent=1 // pred_check
      _
    $region3: #{linear_forward_prepared.1} parent=1 // pred_check_branch
      %11 = sbr.rel (0) target = $region5
    $region4: #{linear_forward_prepared.1} parent=1 // pred_region
      _
    $region5: #{linear_forward_prepared.1} parent=1 // pred_fallthru
      _
    // Predicated region
    $region6: #{linear_forward_prepared.1} parent=1 // pred_check
      _
    $region7: #{linear_forward_prepared.1} parent=1 // pred_check_branch
      %13 = sbr.rel (0) target = $region9
    $region8: #{linear_forward_prepared.1} parent=1 // pred_region
      %15 = vsyncadd [#allocation3], 0
      %s16 = sshll.u32 %s1, 4
      %s17 = int_to_ptr.hbm [resolvable:$true] %s16
      %s18 = sshll.u32 [#allocation2], 4
      %s19 = int_to_ptr.vmem [resolvable:$true] %s18
      %24 = dma.hbm_to_vmem [thread:$0]  %s17, 256, %s19, [#allocation3], 64, 64, 4
    $region9: #{linear_forward_prepared.1} parent=1 // pred_fallthru
      _
    // Predicated region
    $region10: #{linear_forward_prepared.1} parent=1 // pred_check
      _
    $region11: #{linear_forward_prepared.1} parent=1 // pred_check_branch
      %26 = sbr.rel (0) target = $region13
    $region12: #{linear_forward_prepared.1} parent=1 // pred_region
      _
    $region13: #{linear_forward_prepared.1} parent=1 // pred_fallthru
      _
    // Predicated region
    $region14: #{linear_forward_prepared.1} parent=1 // pred_check
      _
    $region15: #{linear_forward_prepared.1} parent=1 // pred_check_branch
      %28 = sbr.rel (0) target = $region17
    $region16: #{linear_forward_prepared.1} parent=1 // pred_region
      %30 = dma.done [#allocation3], 256
    $region17: #{linear_forward_prepared.1} parent=1 // pred_fallthru
      _
    %v32 = vld [vmem:[%s0] sm:$0xf]
    %v33 = vld [vmem:[#allocation2] sm:$0xf]
    %v34 = vld [vmem:[#allocation2 + $0x4] sm:$0xf]
    %v35 = vld [vmem:[#allocation2 + $0x8] sm:$0xf]
    %v36 = vld [vmem:[#allocation2 + $0xc] sm:$0xf]
    %v37 = vld [vmem:[%s2] sm:$0x1]
    %v39 = vperm.slane %v37, 0
    %v45 = vunpack.c.l.b16 %v33
    %v46 = vunpack.c.l.b16 %v34
    %v47 = vunpack.c.l.b16 %v35
    %v48 = vunpack.c.l.b16 %v36
    %v49 = vpack.c.b16 %v46, %v45
    %v50 = vpack.c.b16 %v48, %v47
    %vm53 = vcmask 261120
    %v55 = vsel %vm53, %v32, 0
    %57 = vmatpush.bf16.msra.mxu0 0
    %58 = vmatpush.bf16.msra.mxu0 0
    %59 = vmatpush.bf16.msra.mxu0 0
    %60 = vmatpush.bf16.msra.mxu0 0
    %61 = vmatpush.bf16.msra.mxu0 0
    %62 = vmatpush.bf16.msra.mxu0 0
    %63 = vmatpush.bf16.msra.mxu0 %v50
    %64 = vmatpush.bf16.msra.mxu0 %v49
    %65 = vmatmul.bf16.gmra.mxu0 %v55
    %v66 = vpop.f32.mrf.mxu0
    %v67 = vadd.f32 %v39, %v66
    %v68 = vpop.f32.mrf.mxu0
    %69 = vdwg.mxu0
    %70 = vst [vmem:[#allocation5] sm:$0xff] %v67
    // Predicated region
    $region18: #{linear_forward_prepared.1} parent=1 // pred_check
      _
    $region19: #{linear_forward_prepared.1} parent=1 // pred_check_branch
      %72 = sbr.rel (0) target = $region21
    $region20: #{linear_forward_prepared.1} parent=1 // pred_region
      %74 = vsyncadd [#allocation4], 0
      %s76 = sshll.u32 [#allocation5], 4
      %s77 = int_to_ptr.vmem [resolvable:$true] %s76
      %s78 = sshll.u32 %s3, 4
      %s79 = int_to_ptr.hbm [resolvable:$true] %s78
      %81 = dma.vmem_to_hbm [thread:$0]  %s77, 128, %s79, [#allocation4]
    $region21: #{linear_forward_prepared.1} parent=1 // pred_fallthru
      _
    // Predicated region
    $region22: #{linear_forward_prepared.1} parent=1 // pred_check
      _
    $region23: #{linear_forward_prepared.1} parent=1 // pred_check_branch
      %83 = sbr.rel (0) target = $region25
    $region24: #{linear_forward_prepared.1} parent=1 // pred_region
      %85 = dma.done [#allocation4], 128
    $region25: #{linear_forward_prepared.1} parent=1 // pred_fallthru
      _
    %86 = vsyncpa [#allocation3], 1
    %87 = vsyncpa [#allocation4], 1

</llo_original>
